<compile_context>
chip_gen: v7x
topology: tpu7x:2x2x1
jax: 0.10.0
libtpu: 0.0.40
codegen_flags: <defaults>
</compile_context>

<pallas_src>
import functools

import jax
import jax.numpy as jnp
from jax.experimental import pallas as pl
from jax.experimental.pallas import tpu as pltpu


# ---------------------------------------------------------------------------
# Kernel 1: 1x1 conv (BN folded) + bias + LeakyReLU on flattened rows.
# ---------------------------------------------------------------------------
def _conv1x1_bn_kernel(x_ref, w_ref, b_ref, o_ref, *, neg_slope):
    y = jnp.dot(x_ref[...], w_ref[...], preferred_element_type=jnp.float32)
    y = y + b_ref[...]
    y = jnp.where(y >= 0, y, y * neg_slope)
    o_ref[...] = y.astype(o_ref.dtype)


def conv1x1_bn(x, w, bias, *, neg_slope):
    """x: (N,H,W,Cin) NHWC.  w: (Cin,Cout) BN-folded.  bias: (Cout,)."""
    N, H, W, Cin = x.shape
    Cout = w.shape[-1]
    M = N * H * W
    xf = x.reshape(M, Cin)
    tm = M if M <= 1024 else 1024  # full dim or a multiple of 8 -> legal tile
    kern = functools.partial(_conv1x1_bn_kernel, neg_slope=neg_slope)
    out = pl.pallas_call(
        kern,
        out_shape=jax.ShapeDtypeStruct((M, Cout), x.dtype),
        grid=(pl.cdiv(M, tm),),
        in_specs=[
            pl.BlockSpec((tm, Cin), lambda i: (i, 0)),
            pl.BlockSpec((Cin, Cout), lambda i: (0, 0)),
            pl.BlockSpec((1, Cout), lambda i: (0, 0)),
        ],
        out_specs=pl.BlockSpec((tm, Cout), lambda i: (i, 0)),
        compiler_params=pltpu.CompilerParams(
            dimension_semantics=("parallel",)),
    )(xf, w, bias.reshape(1, Cout))
    return out.reshape(N, H, W, Cout)


# ---------------------------------------------------------------------------
# Kernel 2: fused (lateral + upsampled) add -> 3x3 conv (pad 1, BN folded)
#           -> bias -> LeakyReLU.  Halo built in registers; dx folded into K.
# ---------------------------------------------------------------------------
def _merge_bn_kernel(lat_ref, up_ref, w_ref, b_ref, o_ref, *, neg_slope):
    # lat_ref/up_ref : (1, H, W, C)
    # w_ref          : (3, 3*C, Cout)   index = (dy, dx*C + c, cout), BN-folded
    # b_ref          : (1, Cout)
    # o_ref          : (1, H, W, Cout)
    H, W, C = lat_ref.shape[1], lat_ref.shape[2], lat_ref.shape[3]
    Cout = o_ref.shape[3]

    fused = (lat_ref[0] + up_ref[0]).astype(jnp.float32)        # (H, W, C)
    zc = jnp.zeros((H, 1, C), jnp.float32)
    padded_w = jnp.concatenate([zc, fused, zc], axis=1)          # (H, W+2, C)
    zr = jnp.zeros((1, W + 2, C), jnp.float32)
    padded = jnp.concatenate([zr, padded_w, zr], axis=0)         # (H+2, W+2, C)

    acc = jnp.zeros((H * W, Cout), jnp.float32)
    for dy in range(3):                                          # 3 matmuls, K = 3*C
        slab = padded[dy:dy + H]                                 # (H, W+2, C)
        cols = jnp.concatenate(                                  # im2col along W
            [slab[:, 0:W, :], slab[:, 1:W + 1, :], slab[:, 2:W + 2, :]],
            axis=-1)                                             # (H, W, 3C)
        acc = acc + jnp.dot(cols.reshape(H * W, 3 * C), w_ref[dy],
                            preferred_element_type=jnp.float32)

    y = acc + b_ref[...]
    y = jnp.where(y >= 0, y, y * neg_slope)
    o_ref[0] = y.reshape(H, W, Cout).astype(o_ref.dtype)


def merge_conv_bn(lat, up, w, bias, *, neg_slope):
    """(lat + up) -> 3x3 conv_bn (stride 1, pad 1) -> leaky.  NHWC.
    w: (3,3,C,Cout) HWIO with BN scale already folded in."""
    N, H, W, C = lat.shape
    Cout = w.shape[-1]
    w_im = w.reshape(3, 3 * C, Cout)                             # fold dx into K
    kern = functools.partial(_merge_bn_kernel, neg_slope=neg_slope)
    return pl.pallas_call(
        kern,
        out_shape=jax.ShapeDtypeStruct((N, H, W, Cout), lat.dtype),
        grid=(N,),
        in_specs=[
            pl.BlockSpec((1, H, W, C), lambda n: (n, 0, 0, 0)),
            pl.BlockSpec((1, H, W, C), lambda n: (n, 0, 0, 0)),
            pl.BlockSpec((3, 3 * C, Cout), lambda n: (0, 0, 0)),
            pl.BlockSpec((1, Cout), lambda n: (0, 0)),
        ],
        out_specs=pl.BlockSpec((1, H, W, Cout), lambda n: (n, 0, 0, 0)),
        compiler_params=pltpu.CompilerParams(
            dimension_semantics=("parallel",)),
    )(lat, up, w_im, bias.reshape(1, Cout))


# ---------------------------------------------------------------------------
# Nearest-neighbour resize (F.interpolate mode='nearest'), NHWC.
# TODO(synk): fuse this gather into the merge kernel; kept as a cheap XLA
#             gather so arbitrary output sizes match F.interpolate exactly.
# ---------------------------------------------------------------------------
def nearest_upsample(x, out_h, out_w):
    N, H, W, C = x.shape
    hi = (jnp.arange(out_h) * H) // out_h
    wi = (jnp.arange(out_w) * W) // out_w
    return x[:, hi][:, :, wi]


# ---------------------------------------------------------------------------
# Parameter construction (deterministic, synthetic) + BN folding
# ---------------------------------------------------------------------------
def _make_conv_bn_params(key, kh, kw, cin, cout, eps=1e-5):
    kwt, kg, kb, km, kv = jax.random.split(key, 5)
    fan_in = cin * kh * kw
    w = jax.random.normal(kwt, (kh, kw, cin, cout), jnp.float32) * (2.0 / fan_in) ** 0.5
    gamma = jax.random.uniform(kg, (cout,), jnp.float32, 0.5, 1.5)
    beta = jax.random.normal(kb, (cout,), jnp.float32) * 0.1
    mean = jax.random.normal(km, (cout,), jnp.float32) * 0.1
    var = jax.random.uniform(kv, (cout,), jnp.float32, 0.5, 1.5)
    scale = gamma / jnp.sqrt(var + eps)
    # Inference-mode BN folded into the conv: conv(w*scale) + (beta - mean*scale)
    return {"w": w * scale, "b": beta - mean * scale}


def init_fpn_params(key, in_channels_list, out_channels):
    ks = jax.random.split(key, 5)
    return {
        "output1": _make_conv_bn_params(ks[0], 1, 1, in_channels_list[0], out_channels),
        "output2": _make_conv_bn_params(ks[1], 1, 1, in_channels_list[1], out_channels),
        "output3": _make_conv_bn_params(ks[2], 1, 1, in_channels_list[2], out_channels),
        "merge1":  _make_conv_bn_params(ks[3], 3, 3, out_channels, out_channels),
        "merge2":  _make_conv_bn_params(ks[4], 3, 3, out_channels, out_channels),
    }


# ---------------------------------------------------------------------------
# FPN forward (NHWC).  inputs = [x1, x2, x3] fine -> coarse, like the PyTorch
# module's list(input.values()).
# ---------------------------------------------------------------------------
def fpn_forward(inputs, params, out_channels):
    leaky = 0.1 if out_channels <= 64 else 0.0

    p = params["output1"]
    o1 = conv1x1_bn(inputs[0], p["w"][0, 0], p["b"], neg_slope=leaky)
    p = params["output2"]
    o2 = conv1x1_bn(inputs[1], p["w"][0, 0], p["b"], neg_slope=leaky)
    p = params["output3"]
    o3 = conv1x1_bn(inputs[2], p["w"][0, 0], p["b"], neg_slope=leaky)

    up3 = nearest_upsample(o3, o2.shape[1], o2.shape[2])
    p = params["merge2"]
    o2 = merge_conv_bn(o2, up3, p["w"], p["b"], neg_slope=leaky)   # add fused

    up2 = nearest_upsample(o2, o1.shape[1], o1.shape[2])
    p = params["merge1"]
    o1 = merge_conv_bn(o1, up2, p["w"], p["b"], neg_slope=leaky)   # add fused

    return [o1, o2, o3]


# ---------------------------------------------------------------------------
# Pure-JAX reference (sanity check against the same folded parameters)
# ---------------------------------------------------------------------------
def _ref_conv_bn(x, w, b, neg_slope, pad):
    y = jax.lax.conv_general_dilated(
        x, w, window_strides=(1, 1), padding=((pad, pad), (pad, pad)),
        dimension_numbers=("NHWC", "HWIO", "NHWC"))
    y = y + b
    return jnp.where(y >= 0, y, y * neg_slope)


def fpn_forward_ref(inputs, params, out_channels):
    leaky = 0.1 if out_channels <= 64 else 0.0
    o1 = _ref_conv_bn(inputs[0], params["output1"]["w"], params["output1"]["b"], leaky, 0)
    o2 = _ref_conv_bn(inputs[1], params["output2"]["w"], params["output2"]["b"], leaky, 0)
    o3 = _ref_conv_bn(inputs[2], params["output3"]["w"], params["output3"]["b"], leaky, 0)
    up3 = nearest_upsample(o3, o2.shape[1], o2.shape[2])
    o2 = _ref_conv_bn(o2 + up3, params["merge2"]["w"], params["merge2"]["b"], leaky, 1)
    up2 = nearest_upsample(o2, o1.shape[1], o1.shape[2])
    o1 = _ref_conv_bn(o1 + up2, params["merge1"]["w"], params["merge1"]["b"], leaky, 1)
    return [o1, o2, o3]


if __name__ == "__main__":
    key = jax.random.PRNGKey(0)
    kx1, kx2, kx3, kp = jax.random.split(key, 4)

    N = 2
    in_channels_list = [16, 32, 64]
    out_channels = 64                 # <= 64 -> leaky = 0.1 (per the spec)

    # Three pyramid levels (fine -> coarse), NHWC.
    x1 = jax.random.normal(kx1, (N, 16, 16, in_channels_list[0]), jnp.float32)
    x2 = jax.random.normal(kx2, (N, 8, 8, in_channels_list[1]), jnp.float32)
    x3 = jax.random.normal(kx3, (N, 4, 4, in_channels_list[2]), jnp.float32)

    params = init_fpn_params(kp, in_channels_list, out_channels)

    outs = jax.block_until_ready(fpn_forward([x1, x2, x3], params, out_channels))
    assert outs[0].shape == (N, 16, 16, out_channels), outs[0].shape
    assert outs[1].shape == (N, 8, 8, out_channels), outs[1].shape
    assert outs[2].shape == (N, 4, 4, out_channels), outs[2].shape

    refs = jax.block_until_ready(fpn_forward_ref([x1, x2, x3], params, out_channels))
    for o, r in zip(outs, refs):
        err = float(jnp.max(jnp.abs(o - r)))
        assert jnp.allclose(o, r, rtol=1e-3, atol=1e-3), err

    print("KERNEL_OK")
</pallas_src>

<mosaic_0001>
module attributes {stable_mosaic.version = 11 : i64} {
  func.func @_conv1x1_bn_kernel(%arg0: i32, %arg1: memref<512x16xf32, #tpu.memory_space<vmem>>, %arg2: memref<16x64xf32, #tpu.memory_space<vmem>>, %arg3: memref<1x64xf32, #tpu.memory_space<vmem>>, %arg4: memref<512x64xf32, #tpu.memory_space<vmem>>) attributes {dimension_semantics = [#tpu.dimension_semantics<parallel>], iteration_bounds = array<i64: 1>, scalar_prefetch = 0 : i64, scratch_operands = 0 : i64, tpu.core_type = #tpu.core_type<tc>, window_params = [{transform_indices = @transform_0, window_bounds = array<i64: 512, 16>}, {pipeline_mode = #tpu.pipeline_mode<synchronous>, transform_indices = @transform_1, window_bounds = array<i64: 16, 64>}, {pipeline_mode = #tpu.pipeline_mode<synchronous>, transform_indices = @transform_2, window_bounds = array<i64: 1, 64>}, {transform_indices = @transform_3, window_bounds = array<i64: 512, 64>}]} {
    %c0 = arith.constant 0 : index
    %c0_0 = arith.constant 0 : index
    %0 = vector.load %arg1[%c0, %c0_0] : memref<512x16xf32, #tpu.memory_space<vmem>>, vector<512x16xf32>
    %c0_1 = arith.constant 0 : index
    %c0_2 = arith.constant 0 : index
    %1 = vector.load %arg2[%c0_1, %c0_2] : memref<16x64xf32, #tpu.memory_space<vmem>>, vector<16x64xf32>
    %cst = arith.constant dense<0.000000e+00> : vector<512x64xf32>
    %2 = tpu.matmul %0, %1, %cst {dimension_numbers = #tpu.dot_dimension_numbers<[1], [0], [0], [1], [0, 0, 1, 1], [], []>} : vector<512x16xf32>, vector<16x64xf32>, vector<512x64xf32> -> vector<512x64xf32>
    %c0_3 = arith.constant 0 : index
    %c0_4 = arith.constant 0 : index
    %3 = vector.load %arg3[%c0_3, %c0_4] : memref<1x64xf32, #tpu.memory_space<vmem>>, vector<1x64xf32>
    %4 = vector.broadcast %3 : vector<1x64xf32> to vector<512x64xf32>
    %5 = arith.addf %2, %4 : vector<512x64xf32>
    %cst_5 = arith.constant 0.000000e+00 : f32
    %6 = vector.broadcast %cst_5 : f32 to vector<512x64xf32>
    %7 = arith.cmpf oge, %5, %6 : vector<512x64xf32>
    %cst_6 = arith.constant 1.000000e-01 : f32
    %8 = vector.broadcast %cst_6 : f32 to vector<512x64xf32>
    %9 = arith.mulf %5, %8 : vector<512x64xf32>
    %10 = arith.select %7, %5, %9 : vector<512x64xi1>, vector<512x64xf32>
    %c0_7 = arith.constant 0 : index
    %c0_8 = arith.constant 0 : index
    %11 = vector.load %arg4[%c0_7, %c0_8] : memref<512x64xf32, #tpu.memory_space<vmem>>, vector<512x64xf32>
    tpu.vector_store %arg4[%c0_7, %c0_8], %10 {strides = array<i32>} : memref<512x64xf32, #tpu.memory_space<vmem>>, vector<512x64xf32>,
    return
  }
  func.func @transform_0(%arg0: i32) -> (i32, i32) {
    %c0_i32 = arith.constant 0 : i32
    %c0_i32_0 = arith.constant 0 : i32
    return %arg0, %c0_i32 : i32, i32
  }
  func.func @transform_1(%arg0: i32) -> (i32, i32) {
    %c0_i32 = arith.constant 0 : i32
    %c0_i32_0 = arith.constant 0 : i32
    %c0_i32_1 = arith.constant 0 : i32
    return %c0_i32, %c0_i32_0 : i32, i32
  }
  func.func @transform_2(%arg0: i32) -> (i32, i32) {
    %c0_i32 = arith.constant 0 : i32
    %c0_i32_0 = arith.constant 0 : i32
    %c0_i32_1 = arith.constant 0 : i32
    return %c0_i32, %c0_i32_0 : i32, i32
  }
  func.func @transform_3(%arg0: i32) -> (i32, i32) {
    %c0_i32 = arith.constant 0 : i32
    %c0_i32_0 = arith.constant 0 : i32
    return %arg0, %c0_i32 : i32, i32
  }
}

</mosaic_0001>

<llo_original>
// kernel: tpu_custom_call.1
$region0: #{tpu_custom_call.1}
  #allocation0 [shape = 'u32[]', space=smem, size = 0x4, offset = 0x4, fixed_abs, tag = 'smem constant byte address 0x4 - core index']
  #allocation1 [shape = 'u32[144,128]{1,0:T(1,128)}', space=vmem, size = 0x12000, scoped, tag = 'internal scratch']
  %s0 = inlined_call_operand.vmem [shape: f32[512,16], index: 0, kind: input, shape index: {}]
  %s1 = inlined_call_operand.vmem [shape: f32[16,64], index: 1, kind: input, shape index: {}]
  %s2 = inlined_call_operand.vmem [shape: f32[1,64], index: 2, kind: input, shape index: {}]
  %s3 = inlined_call_operand.vmem [shape: f32[512,64], index: 3, kind: output, shape index: {}]
  %s4 = sld [smem:[#allocation0]]
  $region22: #{tpu_custom_call.1} parent=0
    _
  %s6 = ssub.s32 1, %s4
  %s7 = scalar_select 0, %s6, %s4
  // Predicated region
  $region2: #{tpu_custom_call.1} parent=0 // pred_check
    _
  $region3: #{tpu_custom_call.1} parent=0 // pred_check_branch
    %9 = sbr.rel (0) target = $region5
  $region4: #{tpu_custom_call.1} parent=0 // pred_region
    _
  $region5: #{tpu_custom_call.1} parent=0 // pred_fallthru
    _
  // Predicated region
  $region6: #{tpu_custom_call.1} parent=0 // pred_check
    _
  $region7: #{tpu_custom_call.1} parent=0 // pred_check_branch
    %11 = sbr.rel (0) target = $region9
  $region8: #{tpu_custom_call.1} parent=0 // pred_region
    _
  $region9: #{tpu_custom_call.1} parent=0 // pred_fallthru
    _
  // Predicated region
  $region10: #{tpu_custom_call.1} parent=0 // pred_check
    _
  $region11: #{tpu_custom_call.1} parent=0 // pred_check_branch
    %13 = sbr.rel (0) target = $region13
  $region12: #{tpu_custom_call.1} parent=0 // pred_region
    _
  $region13: #{tpu_custom_call.1} parent=0 // pred_fallthru
    _
  %v14 = vld [vmem:[%s0] sm:$0xff]
  %v15 = vld [vmem:[%s0 + $0x8] sm:$0xff]
  %v16 = vld [vmem:[%s0 + $0x10] sm:$0xff]
  %v17 = vld [vmem:[%s0 + $0x18] sm:$0xff]
  %v18 = vld [vmem:[%s0 + $0x20] sm:$0xff]
  %v19 = vld [vmem:[%s0 + $0x28] sm:$0xff]
  %v20 = vld [vmem:[%s0 + $0x30] sm:$0xff]
  %v21 = vld [vmem:[%s0 + $0x38] sm:$0xff]
  %v22 = vld [vmem:[%s0 + $0x40] sm:$0xff]
  %v23 = vld [vmem:[%s0 + $0x48] sm:$0xff]
  %v24 = vld [vmem:[%s0 + $0x50] sm:$0xff]
  %v25 = vld [vmem:[%s0 + $0x58] sm:$0xff]
  %v26 = vld [vmem:[%s0 + $0x60] sm:$0xff]
  %v27 = vld [vmem:[%s0 + $0x68] sm:$0xff]
  %v28 = vld [vmem:[%s0 + $0x70] sm:$0xff]
  %v29 = vld [vmem:[%s0 + $0x78] sm:$0xff]
  %v30 = vld [vmem:[%s0 + $0x80] sm:$0xff]
  %v31 = vld [vmem:[%s0 + $0x88] sm:$0xff]
  %v32 = vld [vmem:[%s0 + $0x90] sm:$0xff]
  %v33 = vld [vmem:[%s0 + $0x98] sm:$0xff]
  %v34 = vld [vmem:[%s0 + $0xa0] sm:$0xff]
  %v35 = vld [vmem:[%s0 + $0xa8] sm:$0xff]
  %v36 = vld [vmem:[%s0 + $0xb0] sm:$0xff]
  %v37 = vld [vmem:[%s0 + $0xb8] sm:$0xff]
  %v38 = vld [vmem:[%s0 + $0xc0] sm:$0xff]
  %v39 = vld [vmem:[%s0 + $0xc8] sm:$0xff]
  %v40 = vld [vmem:[%s0 + $0xd0] sm:$0xff]
  %v41 = vld [vmem:[%s0 + $0xd8] sm:$0xff]
  %v42 = vld [vmem:[%s0 + $0xe0] sm:$0xff]
  %v43 = vld [vmem:[%s0 + $0xe8] sm:$0xff]
  %v44 = vld [vmem:[%s0 + $0xf0] sm:$0xff]
  %v45 = vld [vmem:[%s0 + $0xf8] sm:$0xff]
  %v46 = vld [vmem:[%s0 + $0x100] sm:$0xff]
  %v47 = vld [vmem:[%s0 + $0x108] sm:$0xff]
  %v48 = vld [vmem:[%s0 + $0x110] sm:$0xff]
  %v49 = vld [vmem:[%s0 + $0x118] sm:$0xff]
  %v50 = vld [vmem:[%s0 + $0x120] sm:$0xff]
  %v51 = vld [vmem:[%s0 + $0x128] sm:$0xff]
  %v52 = vld [vmem:[%s0 + $0x130] sm:$0xff]
  %v53 = vld [vmem:[%s0 + $0x138] sm:$0xff]
  %v54 = vld [vmem:[%s0 + $0x140] sm:$0xff]
  %v55 = vld [vmem:[%s0 + $0x148] sm:$0xff]
  %v56 = vld [vmem:[%s0 + $0x150] sm:$0xff]
  %v57 = vld [vmem:[%s0 + $0x158] sm:$0xff]
  %v58 = vld [vmem:[%s0 + $0x160] sm:$0xff]
  %v59 = vld [vmem:[%s0 + $0x168] sm:$0xff]
  %v60 = vld [vmem:[%s0 + $0x170] sm:$0xff]
  %v61 = vld [vmem:[%s0 + $0x178] sm:$0xff]
  %v62 = vld [vmem:[%s0 + $0x180] sm:$0xff]
  %v63 = vld [vmem:[%s0 + $0x188] sm:$0xff]
  %v64 = vld [vmem:[%s0 + $0x190] sm:$0xff]
  %v65 = vld [vmem:[%s0 + $0x198] sm:$0xff]
  %v66 = vld [vmem:[%s0 + $0x1a0] sm:$0xff]
  %v67 = vld [vmem:[%s0 + $0x1a8] sm:$0xff]
  %v68 = vld [vmem:[%s0 + $0x1b0] sm:$0xff]
  %v69 = vld [vmem:[%s0 + $0x1b8] sm:$0xff]
  %v70 = vld [vmem:[%s0 + $0x1c0] sm:$0xff]
  %v71 = vld [vmem:[%s0 + $0x1c8] sm:$0xff]
  %v72 = vld [vmem:[%s0 + $0x1d0] sm:$0xff]
  %v73 = vld [vmem:[%s0 + $0x1d8] sm:$0xff]
  %v74 = vld [vmem:[%s0 + $0x1e0] sm:$0xff]
  %v75 = vld [vmem:[%s0 + $0x1e8] sm:$0xff]
  %v76 = vld [vmem:[%s0 + $0x1f0] sm:$0xff]
  %v77 = vld [vmem:[%s0 + $0x1f8] sm:$0xff]
  %v78 = vld [vmem:[%s1] sm:$0xff]
  %v79 = vld [vmem:[%s1 + $0x8] sm:$0xff]
  %v80 = vld [vmem:[%s2] sm:$0x1]
  %v82 = vlaneseq
  %v83 = vshrl.u32 %v82, 7
  %v84 = vsub.s32 0, %v83
  %v85 = vrot.slane %v80, %v84
  %vm87 = vcmask 130048
  %v89 = vsel %vm87, %v14, 0
  %v92 = vsel %vm87, %v15, 0
  %v95 = vsel %vm87, %v16, 0
  %v98 = vsel %vm87, %v17, 0
  %v101 = vsel %vm87, %v18, 0
  %v104 = vsel %vm87, %v19, 0
  %v107 = vsel %vm87, %v20, 0
  %v110 = vsel %vm87, %v21, 0
  %v113 = vsel %vm87, %v22, 0
  %v116 = vsel %vm87, %v23, 0
  %v119 = vsel %vm87, %v24, 0
  %v122 = vsel %vm87, %v25, 0
  %v125 = vsel %vm87, %v26, 0
  %v128 = vsel %vm87, %v27, 0
  %v131 = vsel %vm87, %v28, 0
  %v134 = vsel %vm87, %v29, 0
  %v137 = vsel %vm87, %v30, 0
  %v140 = vsel %vm87, %v31, 0
  %v143 = vsel %vm87, %v32, 0
  %v146 = vsel %vm87, %v33, 0
  %v149 = vsel %vm87, %v34, 0
  %v152 = vsel %vm87, %v35, 0
  %v155 = vsel %vm87, %v36, 0
  %v158 = vsel %vm87, %v37, 0
  %v161 = vsel %vm87, %v38, 0
  %v164 = vsel %vm87, %v39, 0
  %v167 = vsel %vm87, %v40, 0
  %v170 = vsel %vm87, %v41, 0
  %v173 = vsel %vm87, %v42, 0
  %v176 = vsel %vm87, %v43, 0
  %v179 = vsel %vm87, %v44, 0
  %v182 = vsel %vm87, %v45, 0
  %v185 = vsel %vm87, %v46, 0
  %v188 = vsel %vm87, %v47, 0
  %v191 = vsel %vm87, %v48, 0
  %v194 = vsel %vm87, %v49, 0
  %v197 = vsel %vm87, %v50, 0
  %v200 = vsel %vm87, %v51, 0
  %v203 = vsel %vm87, %v52, 0
  %v206 = vsel %vm87, %v53, 0
  %v209 = vsel %vm87, %v54, 0
  %v212 = vsel %vm87, %v55, 0
  %v215 = vsel %vm87, %v56, 0
  %v218 = vsel %vm87, %v57, 0
  %v221 = vsel %vm87, %v58, 0
  %v224 = vsel %vm87, %v59, 0
  %v227 = vsel %vm87, %v60, 0
  %v230 = vsel %vm87, %v61, 0
  %v233 = vsel %vm87, %v62, 0
  %v236 = vsel %vm87, %v63, 0
  %v239 = vsel %vm87, %v64, 0
  %v242 = vsel %vm87, %v65, 0
  %v245 = vsel %vm87, %v66, 0
  %v248 = vsel %vm87, %v67, 0
  %v251 = vsel %vm87, %v68, 0
  %v254 = vsel %vm87, %v69, 0
  %v257 = vsel %vm87, %v70, 0
  %v260 = vsel %vm87, %v71, 0
  %v263 = vsel %vm87, %v72, 0
  %v266 = vsel %vm87, %v73, 0
  %v269 = vsel %vm87, %v74, 0
  %v272 = vsel %vm87, %v75, 0
  %v275 = vsel %vm87, %v76, 0
  %v278 = vsel %vm87, %v77, 0
  %280 = vmatprep.subr.mxu0 0.0
  %281 = vmatpush1.msra.mxu0 %v78
  %282 = vmatprep.subr.mxu0 0.0
  %283 = vmatpush1.msra.mxu0 %v79
  %284 = vmatprep.subr.mxu0 0.0
  %285 = vmatpush1.msra.mxu0 0.0
  %286 = vmatprep.subr.mxu0 0.0
  %287 = vmatpush1.msra.mxu0 0.0
  %288 = vmatprep.subr.mxu0 0.0
  %289 = vmatpush1.msra.mxu0 0.0
  %290 = vmatprep.subr.mxu0 0.0
  %291 = vmatpush1.msra.mxu0 0.0
  %292 = vmatprep.subr.mxu0 0.0
  %293 = vmatpush1.msra.mxu0 0.0
  %294 = vmatprep.subr.mxu0 0.0
  %295 = vmatpush1.msra.mxu0 0.0
  %296 = vmatprep.subr.mxu0 0.0
  %297 = vmatpush1.msra.mxu0 0.0
  %298 = vmatprep.subr.mxu0 0.0
  %299 = vmatpush1.msra.mxu0 0.0
  %300 = vmatprep.subr.mxu0 0.0
  %301 = vmatpush1.msra.mxu0 0.0
  %302 = vmatprep.subr.mxu0 0.0
  %303 = vmatpush1.msra.mxu0 0.0
  %304 = vmatprep.subr.mxu0 0.0
  %305 = vmatpush1.msra.mxu0 0.0
  %306 = vmatprep.subr.mxu0 0.0
  %307 = vmatpush1.msra.mxu0 0.0
  %308 = vmatprep.subr.mxu0 0.0
  %309 = vmatpush1.msra.mxu0 0.0
  %310 = vmatprep.subr.mxu0 0.0
  %311 = vmatpush1.msra.mxu0 0.0
  %312 = vmatprep.subr.mxu0 0.0
  %313 = vmatpush1.msra.mxu0 0.0
  %314 = vmatprep.subr.mxu0 0.0
  %315 = vmatpush1.msra.mxu0 0.0
  %316 = vmatprep.subr.mxu0 0.0
  %317 = vmatpush1.msra.mxu0 0.0
  %318 = vmatprep.subr.mxu0 0.0
  %319 = vmatpush1.msra.mxu0 0.0
  %320 = vmatprep.subr.mxu0 0.0
  %321 = vmatpush1.msra.mxu0 0.0
  %322 = vmatprep.subr.mxu0 0.0
  %323 = vmatpush1.msra.mxu0 0.0
  %324 = vmatprep.subr.mxu0 0.0
  %325 = vmatpush1.msra.mxu0 0.0
  %326 = vmatprep.subr.mxu0 0.0
  %327 = vmatpush1.msra.mxu0 0.0
  %328 = vmatprep.subr.mxu0 0.0
  %329 = vmatpush1.msra.mxu0 0.0
  %330 = vmatprep.subr.mxu0 0.0
  %331 = vmatpush1.msra.mxu0 0.0
  %332 = vmatprep.subr.mxu0 0.0
  %333 = vmatpush1.msra.mxu0 0.0
  %334 = vmatprep.subr.mxu0 0.0
  %335 = vmatpush1.msra.mxu0 0.0
  %336 = vmatprep.subr.mxu0 0.0
  %337 = vmatpush1.msra.mxu0 0.0
  %338 = vmatprep.subr.mxu0 0.0
  %339 = vmatpush1.msra.mxu0 0.0
  %340 = vmatprep.subr.mxu0 0.0
  %341 = vmatpush1.msra.mxu0 0.0
  %342 = vmatprep.subr.mxu0 0.0
  %343 = vmatpush1.msra.mxu0 0.0
  %344 = vmatprep.mubr.f32.mxu0 0.0
  %345 = vmatmul.mubr.f32.gmra.mrb[0].mxu0 %v89
  %v346 = vpop.f32.mrb[0].mxu0
  %v347 = vadd.f32 %v85, %v346
  %v348 = vpop.f32.mrb[0].mxu0
  %349 = vmatprep.mubr.f32.mxu0 0.0
  %350 = vmatmul.mubr.f32.gmra.mrb[0].mxu0 %v92
  %v351 = vpop.f32.mrb[0].mxu0
  %v352 = vadd.f32 %v85, %v351
  %v353 = vpop.f32.mrb[0].mxu0
  %354 = vmatprep.mubr.f32.mxu0 0.0
  %355 = vmatmul.mubr.f32.gmra.mrb[0].mxu0 %v95
  %v356 = vpop.f32.mrb[0].mxu0
  %v357 = vadd.f32 %v85, %v356
  %v358 = vpop.f32.mrb[0].mxu0
  %359 = vmatprep.mubr.f32.mxu0 0.0
  %360 = vmatmul.mubr.f32.gmra.mrb[0].mxu0 %v98
  %v361 = vpop.f32.mrb[0].mxu0
  %v362 = vadd.f32 %v85, %v361
  %v363 = vpop.f32.mrb[0].mxu0
  %364 = vmatprep.mubr.f32.mxu0 0.0
  %365 = vmatmul.mubr.f32.gmra.mrb[0].mxu0 %v101
  %v366 = vpop.f32.mrb[0].mxu0
  %v367 = vadd.f32 %v85, %v366
  %v368 = vpop.f32.mrb[0].mxu0
  %369 = vmatprep.mubr.f32.mxu0 0.0
  %370 = vmatmul.mubr.f32.gmra.mrb[0].mxu0 %v104
  %v371 = vpop.f32.mrb[0].mxu0
  %v372 = vadd.f32 %v85, %v371
  %v373 = vpop.f32.mrb[0].mxu0
  %374 = vmatprep.mubr.f32.mxu0 0.0
  %375 = vmatmul.mubr.f32.gmra.mrb[0].mxu0 %v107
  %v376 = vpop.f32.mrb[0].mxu0
  %v377 = vadd.f32 %v85, %v376
  %v378 = vpop.f32.mrb[0].mxu0
  %379 = vmatprep.mubr.f32.mxu0 0.0
  %380 = vmatmul.mubr.f32.gmra.mrb[0].mxu0 %v110
  %v381 = vpop.f32.mrb[0].mxu0
  %v382 = vadd.f32 %v85, %v381
  %v383 = vpop.f32.mrb[0].mxu0
  %384 = vmatprep.mubr.f32.mxu0 0.0
  %385 = vmatmul.mubr.f32.gmra.mrb[0].mxu0 %v113
  %v386 = vpop.f32.mrb[0].mxu0
  %v387 = vadd.f32 %v85, %v386
  %v388 = vpop.f32.mrb[0].mxu0
  %389 = vmatprep.mubr.f32.mxu0 0.0
  %390 = vmatmul.mubr.f32.gmra.mrb[0].mxu0 %v116
  %v391 = vpop.f32.mrb[0].mxu0
  %v392 = vadd.f32 %v85, %v391
  %v393 = vpop.f32.mrb[0].mxu0
  %394 = vmatprep.mubr.f32.mxu0 0.0
  %395 = vmatmul.mubr.f32.gmra.mrb[0].mxu0 %v119
  %v396 = vpop.f32.mrb[0].mxu0
  %v397 = vadd.f32 %v85, %v396
  %v398 = vpop.f32.mrb[0].mxu0
  %399 = vmatprep.mubr.f32.mxu0 0.0
  %400 = vmatmul.mubr.f32.gmra.mrb[0].mxu0 %v122
  %v401 = vpop.f32.mrb[0].mxu0
  %v402 = vadd.f32 %v85, %v401
  %v403 = vpop.f32.mrb[0].mxu0
  %404 = vmatprep.mubr.f32.mxu0 0.0
  %405 = vmatmul.mubr.f32.gmra.mrb[0].mxu0 %v125
  %v406 = vpop.f32.mrb[0].mxu0
  %v407 = vadd.f32 %v85, %v406
  %v408 = vpop.f32.mrb[0].mxu0
  %409 = vmatprep.mubr.f32.mxu0 0.0
  %410 = vmatmul.mubr.f32.gmra.mrb[0].mxu0 %v128
  %v411 = vpop.f32.mrb[0].mxu0
  %v412 = vadd.f32 %v85, %v411
  %v413 = vpop.f32.mrb[0].mxu0
  %414 = vmatprep.mubr.f32.mxu0 0.0
  %415 = vmatmul.mubr.f32.gmra.mrb[0].mxu0 %v131
  %v416 = vpop.f32.mrb[0].mxu0
  %v417 = vadd.f32 %v85, %v416
  %v418 = vpop.f32.mrb[0].mxu0
  %419 = vmatprep.mubr.f32.mxu0 0.0
  %420 = vmatmul.mubr.f32.gmra.mrb[0].mxu0 %v134
  %v421 = vpop.f32.mrb[0].mxu0
  %v422 = vadd.f32 %v85, %v421
  %v423 = vpop.f32.mrb[0].mxu0
  %424 = vmatprep.mubr.f32.mxu0 0.0
  %425 = vmatmul.mubr.f32.gmra.mrb[0].mxu0 %v137
  %v426 = vpop.f32.mrb[0].mxu0
  %v427 = vadd.f32 %v85, %v426
  %v428 = vpop.f32.mrb[0].mxu0
  %429 = vmatprep.mubr.f32.mxu0 0.0
  %430 = vmatmul.mubr.f32.gmra.mrb[0].mxu0 %v140
  %v431 = vpop.f32.mrb[0].mxu0
  %v432 = vadd.f32 %v85, %v431
  %v433 = vpop.f32.mrb[0].mxu0
  %434 = vmatprep.mubr.f32.mxu0 0.0
  %435 = vmatmul.mubr.f32.gmra.mrb[0].mxu0 %v143
  %v436 = vpop.f32.mrb[0].mxu0
  %v437 = vadd.f32 %v85, %v436
  %v438 = vpop.f32.mrb[0].mxu0
  %439 = vmatprep.mubr.f32.mxu0 0.0
  %440 = vmatmul.mubr.f32.gmra.mrb[0].mxu0 %v146
  %v441 = vpop.f32.mrb[0].mxu0
  %v442 = vadd.f32 %v85, %v441
  %v443 = vpop.f32.mrb[0].mxu0
  %444 = vmatprep.mubr.f32.mxu0 0.0
  %445 = vmatmul.mubr.f32.gmra.mrb[0].mxu0 %v149
  %v446 = vpop.f32.mrb[0].mxu0
  %v447 = vadd.f32 %v85, %v446
  %v448 = vpop.f32.mrb[0].mxu0
  %449 = vmatprep.mubr.f32.mxu0 0.0
  %450 = vmatmul.mubr.f32.gmra.mrb[0].mxu0 %v152
  %v451 = vpop.f32.mrb[0].mxu0
  %v452 = vadd.f32 %v85, %v451
  %v453 = vpop.f32.mrb[0].mxu0
  %454 = vmatprep.mubr.f32.mxu0 0.0
  %455 = vmatmul.mubr.f32.gmra.mrb[0].mxu0 %v155
  %v456 = vpop.f32.mrb[0].mxu0
  %v457 = vadd.f32 %v85, %v456
  %v458 = vpop.f32.mrb[0].mxu0
  %459 = vmatprep.mubr.f32.mxu0 0.0
  %460 = vmatmul.mubr.f32.gmra.mrb[0].mxu0 %v158
  %v461 = vpop.f32.mrb[0].mxu0
  %v462 = vadd.f32 %v85, %v461
  %v463 = vpop.f32.mrb[0].mxu0
  %464 = vmatprep.mubr.f32.mxu0 0.0
  %465 = vmatmul.mubr.f32.gmra.mrb[0].mxu0 %v161
  %v466 = vpop.f32.mrb[0].mxu0
  %v467 = vadd.f32 %v85, %v466
  %v468 = vpop.f32.mrb[0].mxu0
  %469 = vmatprep.mubr.f32.mxu0 0.0
  %470 = vmatmul.mubr.f32.gmra.mrb[0].mxu0 %v164
  %v471 = vpop.f32.mrb[0].mxu0
  %v472 = vadd.f32 %v85, %v471
  %v473 = vpop.f32.mrb[0].mxu0
  %474 = vmatprep.mubr.f32.mxu0 0.0
  %475 = vmatmul.mubr.f32.gmra.mrb[0].mxu0 %v167
  %v476 = vpop.f32.mrb[0].mxu0
  %v477 = vadd.f32 %v85, %v476
  %v478 = vpop.f32.mrb[0].mxu0
  %479 = vmatprep.mubr.f32.mxu0 0.0
  %480 = vmatmul.mubr.f32.gmra.mrb[0].mxu0 %v170
  %v481 = vpop.f32.mrb[0].mxu0
  %v482 = vadd.f32 %v85, %v481
  %v483 = vpop.f32.mrb[0].mxu0
  %484 = vmatprep.mubr.f32.mxu0 0.0
  %485 = vmatmul.mubr.f32.gmra.mrb[0].mxu0 %v173
  %v486 = vpop.f32.mrb[0].mxu0
  %v487 = vadd.f32 %v85, %v486
  %v488 = vpop.f32.mrb[0].mxu0
  %489 = vmatprep.mubr.f32.mxu0 0.0
  %490 = vmatmul.mubr.f32.gmra.mrb[0].mxu0 %v176
  %v491 = vpop.f32.mrb[0].mxu0
  %v492 = vadd.f32 %v85, %v491
  %v493 = vpop.f32.mrb[0].mxu0
  %494 = vmatprep.mubr.f32.mxu0 0.0
  %495 = vmatmul.mubr.f32.gmra.mrb[0].mxu0 %v179
  %v496 = vpop.f32.mrb[0].mxu0
  %v497 = vadd.f32 %v85, %v496
  %v498 = vpop.f32.mrb[0].mxu0
  %499 = vmatprep.mubr.f32.mxu0 0.0
  %500 = vmatmul.mubr.f32.gmra.mrb[0].mxu0 %v182
  %v501 = vpop.f32.mrb[0].mxu0
  %v502 = vadd.f32 %v85, %v501
  %v503 = vpop.f32.mrb[0].mxu0
  %504 = vmatprep.mubr.f32.mxu0 0.0
  %505 = vmatmul.mubr.f32.gmra.mrb[0].mxu0 %v185
  %v506 = vpop.f32.mrb[0].mxu0
  %v507 = vadd.f32 %v85, %v506
  %v508 = vpop.f32.mrb[0].mxu0
  %509 = vmatprep.mubr.f32.mxu0 0.0
  %510 = vmatmul.mubr.f32.gmra.mrb[0].mxu0 %v188
  %v511 = vpop.f32.mrb[0].mxu0
  %v512 = vadd.f32 %v85, %v511
  %v513 = vpop.f32.mrb[0].mxu0
  %514 = vmatprep.mubr.f32.mxu0 0.0
  %515 = vmatmul.mubr.f32.gmra.mrb[0].mxu0 %v191
  %v516 = vpop.f32.mrb[0].mxu0
  %v517 = vadd.f32 %v85, %v516
  %v518 = vpop.f32.mrb[0].mxu0
  %519 = vmatprep.mubr.f32.mxu0 0.0
  %520 = vmatmul.mubr.f32.gmra.mrb[0].mxu0 %v194
  %v521 = vpop.f32.mrb[0].mxu0
  %v522 = vadd.f32 %v85, %v521
  %v523 = vpop.f32.mrb[0].mxu0
  %524 = vmatprep.mubr.f32.mxu0 0.0
  %525 = vmatmul.mubr.f32.gmra.mrb[0].mxu0 %v197
  %v526 = vpop.f32.mrb[0].mxu0
  %v527 = vadd.f32 %v85, %v526
  %v528 = vpop.f32.mrb[0].mxu0
  %529 = vmatprep.mubr.f32.mxu0 0.0
  %530 = vmatmul.mubr.f32.gmra.mrb[0].mxu0 %v200
  %v531 = vpop.f32.mrb[0].mxu0
  %v532 = vadd.f32 %v85, %v531
  %v533 = vpop.f32.mrb[0].mxu0
  %534 = vmatprep.mubr.f32.mxu0 0.0
  %535 = vmatmul.mubr.f32.gmra.mrb[0].mxu0 %v203
  %v536 = vpop.f32.mrb[0].mxu0
  %v537 = vadd.f32 %v85, %v536
  %v538 = vpop.f32.mrb[0].mxu0
  %539 = vmatprep.mubr.f32.mxu0 0.0
  %540 = vmatmul.mubr.f32.gmra.mrb[0].mxu0 %v206
  %v541 = vpop.f32.mrb[0].mxu0
  %v542 = vadd.f32 %v85, %v541
  %v543 = vpop.f32.mrb[0].mxu0
  %544 = vmatprep.mubr.f32.mxu0 0.0
  %545 = vmatmul.mubr.f32.gmra.mrb[0].mxu0 %v209
  %v546 = vpop.f32.mrb[0].mxu0
  %v547 = vadd.f32 %v85, %v546
  %v548 = vpop.f32.mrb[0].mxu0
  %549 = vmatprep.mubr.f32.mxu0 0.0
  %550 = vmatmul.mubr.f32.gmra.mrb[0].mxu0 %v212
  %v551 = vpop.f32.mrb[0].mxu0
  %v552 = vadd.f32 %v85, %v551
  %v553 = vpop.f32.mrb[0].mxu0
  %554 = vmatprep.mubr.f32.mxu0 0.0
  %555 = vmatmul.mubr.f32.gmra.mrb[0].mxu0 %v215
  %v556 = vpop.f32.mrb[0].mxu0
  %v557 = vadd.f32 %v85, %v556
  %v558 = vpop.f32.mrb[0].mxu0
  %559 = vmatprep.mubr.f32.mxu0 0.0
  %560 = vmatmul.mubr.f32.gmra.mrb[0].mxu0 %v218
  %v561 = vpop.f32.mrb[0].mxu0
  %v562 = vadd.f32 %v85, %v561
  %v563 = vpop.f32.mrb[0].mxu0
  %564 = vmatprep.mubr.f32.mxu0 0.0
  %565 = vmatmul.mubr.f32.gmra.mrb[0].mxu0 %v221
  %v566 = vpop.f32.mrb[0].mxu0
  %v567 = vadd.f32 %v85, %v566
  %v568 = vpop.f32.mrb[0].mxu0
  %569 = vmatprep.mubr.f32.mxu0 0.0
  %570 = vmatmul.mubr.f32.gmra.mrb[0].mxu0 %v224
  %v571 = vpop.f32.mrb[0].mxu0
  %v572 = vadd.f32 %v85, %v571
  %v573 = vpop.f32.mrb[0].mxu0
  %574 = vmatprep.mubr.f32.mxu0 0.0
  %575 = vmatmul.mubr.f32.gmra.mrb[0].mxu0 %v227
  %v576 = vpop.f32.mrb[0].mxu0
  %v577 = vadd.f32 %v85, %v576
  %v578 = vpop.f32.mrb[0].mxu0
  %579 = vmatprep.mubr.f32.mxu0 0.0
  %580 = vmatmul.mubr.f32.gmra.mrb[0].mxu0 %v230
  %v581 = vpop.f32.mrb[0].mxu0
  %v582 = vadd.f32 %v85, %v581
  %v583 = vpop.f32.mrb[0].mxu0
  %584 = vmatprep.mubr.f32.mxu0 0.0
  %585 = vmatmul.mubr.f32.gmra.mrb[0].mxu0 %v233
  %v586 = vpop.f32.mrb[0].mxu0
  %v587 = vadd.f32 %v85, %v586
  %v588 = vpop.f32.mrb[0].mxu0
  %589 = vmatprep.mubr.f32.mxu0 0.0
  %590 = vmatmul.mubr.f32.gmra.mrb[0].mxu0 %v236
  %v591 = vpop.f32.mrb[0].mxu0
  %v592 = vadd.f32 %v85, %v591
  %v593 = vpop.f32.mrb[0].mxu0
  %594 = vmatprep.mubr.f32.mxu0 0.0
  %595 = vmatmul.mubr.f32.gmra.mrb[0].mxu0 %v239
  %v596 = vpop.f32.mrb[0].mxu0
  %v597 = vadd.f32 %v85, %v596
  %v598 = vpop.f32.mrb[0].mxu0
  %599 = vmatprep.mubr.f32.mxu0 0.0
  %600 = vmatmul.mubr.f32.gmra.mrb[0].mxu0 %v242
  %v601 = vpop.f32.mrb[0].mxu0
  %v602 = vadd.f32 %v85, %v601
  %v603 = vpop.f32.mrb[0].mxu0
  %604 = vmatprep.mubr.f32.mxu0 0.0
  %605 = vmatmul.mubr.f32.gmra.mrb[0].mxu0 %v245
  %v606 = vpop.f32.mrb[0].mxu0
  %v607 = vadd.f32 %v85, %v606
  %v608 = vpop.f32.mrb[0].mxu0
  %609 = vmatprep.mubr.f32.mxu0 0.0
  %610 = vmatmul.mubr.f32.gmra.mrb[0].mxu0 %v248
  %v611 = vpop.f32.mrb[0].mxu0
  %v612 = vadd.f32 %v85, %v611
  %v613 = vpop.f32.mrb[0].mxu0
  %614 = vmatprep.mubr.f32.mxu0 0.0
  %615 = vmatmul.mubr.f32.gmra.mrb[0].mxu0 %v251
  %v616 = vpop.f32.mrb[0].mxu0
  %v617 = vadd.f32 %v85, %v616
  %v618 = vpop.f32.mrb[0].mxu0
  %619 = vmatprep.mubr.f32.mxu0 0.0
  %620 = vmatmul.mubr.f32.gmra.mrb[0].mxu0 %v254
  %v621 = vpop.f32.mrb[0].mxu0
  %v622 = vadd.f32 %v85, %v621
  %v623 = vpop.f32.mrb[0].mxu0
  %624 = vmatprep.mubr.f32.mxu0 0.0
  %625 = vmatmul.mubr.f32.gmra.mrb[0].mxu0 %v257
  %v626 = vpop.f32.mrb[0].mxu0
  %v627 = vadd.f32 %v85, %v626
  %v628 = vpop.f32.mrb[0].mxu0
  %629 = vmatprep.mubr.f32.mxu0 0.0
  %630 = vmatmul.mubr.f32.gmra.mrb[0].mxu0 %v260
  %v631 = vpop.f32.mrb[0].mxu0
  %v632 = vadd.f32 %v85, %v631
  %v633 = vpop.f32.mrb[0].mxu0
  %634 = vmatprep.mubr.f32.mxu0 0.0
  %635 = vmatmul.mubr.f32.gmra.mrb[0].mxu0 %v263
  %v636 = vpop.f32.mrb[0].mxu0
  %v637 = vadd.f32 %v85, %v636
  %v638 = vpop.f32.mrb[0].mxu0
  %639 = vmatprep.mubr.f32.mxu0 0.0
  %640 = vmatmul.mubr.f32.gmra.mrb[0].mxu0 %v266
  %v641 = vpop.f32.mrb[0].mxu0
  %v642 = vadd.f32 %v85, %v641
  %v643 = vpop.f32.mrb[0].mxu0
  %644 = vmatprep.mubr.f32.mxu0 0.0
  %645 = vmatmul.mubr.f32.gmra.mrb[0].mxu0 %v269
  %v646 = vpop.f32.mrb[0].mxu0
  %v647 = vadd.f32 %v85, %v646
  %v648 = vpop.f32.mrb[0].mxu0
  %649 = vmatprep.mubr.f32.mxu0 0.0
  %650 = vmatmul.mubr.f32.gmra.mrb[0].mxu0 %v272
  %v651 = vpop.f32.mrb[0].mxu0
  %v652 = vadd.f32 %v85, %v651
  %v653 = vpop.f32.mrb[0].mxu0
  %654 = vmatprep.mubr.f32.mxu0 0.0
  %655 = vmatmul.mubr.f32.gmra.mrb[0].mxu0 %v275
  %v656 = vpop.f32.mrb[0].mxu0
  %v657 = vadd.f32 %v85, %v656
  %v658 = vpop.f32.mrb[0].mxu0
  %659 = vmatprep.mubr.f32.mxu0 0.0
  %660 = vmatmul.mubr.f32.gmra.mrb[0].mxu0 %v278
  %v661 = vpop.f32.mrb[0].mxu0
  %v662 = vadd.f32 %v85, %v661
  %v663 = vpop.f32.mrb[0].mxu0
  %664 = vdwg.mxu0
  %vm665 = vcmp.ge.f32.partialorder %v347, 0.0
  %vm666 = vcmp.ge.f32.partialorder %v352, 0.0
  %vm667 = vcmp.ge.f32.partialorder %v357, 0.0
  %vm668 = vcmp.ge.f32.partialorder %v362, 0.0
  %vm669 = vcmp.ge.f32.partialorder %v367, 0.0
  %vm670 = vcmp.ge.f32.partialorder %v372, 0.0
  %vm671 = vcmp.ge.f32.partialorder %v377, 0.0
  %vm672 = vcmp.ge.f32.partialorder %v382, 0.0
  %vm673 = vcmp.ge.f32.partialorder %v387, 0.0
  %vm674 = vcmp.ge.f32.partialorder %v392, 0.0
  %vm675 = vcmp.ge.f32.partialorder %v397, 0.0
  %vm676 = vcmp.ge.f32.partialorder %v402, 0.0
  %vm677 = vcmp.ge.f32.partialorder %v407, 0.0
  %vm678 = vcmp.ge.f32.partialorder %v412, 0.0
  %vm679 = vcmp.ge.f32.partialorder %v417, 0.0
  %vm680 = vcmp.ge.f32.partialorder %v422, 0.0
  %vm681 = vcmp.ge.f32.partialorder %v427, 0.0
  %vm682 = vcmp.ge.f32.partialorder %v432, 0.0
  %vm683 = vcmp.ge.f32.partialorder %v437, 0.0
  %vm684 = vcmp.ge.f32.partialorder %v442, 0.0
  %vm685 = vcmp.ge.f32.partialorder %v447, 0.0
  %vm686 = vcmp.ge.f32.partialorder %v452, 0.0
  %vm687 = vcmp.ge.f32.partialorder %v457, 0.0
  %vm688 = vcmp.ge.f32.partialorder %v462, 0.0
  %vm689 = vcmp.ge.f32.partialorder %v467, 0.0
  %vm690 = vcmp.ge.f32.partialorder %v472, 0.0
  %vm691 = vcmp.ge.f32.partialorder %v477, 0.0
  %vm692 = vcmp.ge.f32.partialorder %v482, 0.0
  %vm693 = vcmp.ge.f32.partialorder %v487, 0.0
  %vm694 = vcmp.ge.f32.partialorder %v492, 0.0
  %vm695 = vcmp.ge.f32.partialorder %v497, 0.0
  %vm696 = vcmp.ge.f32.partialorder %v502, 0.0
  %vm697 = vcmp.ge.f32.partialorder %v507, 0.0
  %vm698 = vcmp.ge.f32.partialorder %v512, 0.0
  %vm699 = vcmp.ge.f32.partialorder %v517, 0.0
  %vm700 = vcmp.ge.f32.partialorder %v522, 0.0
  %vm701 = vcmp.ge.f32.partialorder %v527, 0.0
  %vm702 = vcmp.ge.f32.partialorder %v532, 0.0
  %vm703 = vcmp.ge.f32.partialorder %v537, 0.0
  %vm704 = vcmp.ge.f32.partialorder %v542, 0.0
  %vm705 = vcmp.ge.f32.partialorder %v547, 0.0
  %vm706 = vcmp.ge.f32.partialorder %v552, 0.0
  %vm707 = vcmp.ge.f32.partialorder %v557, 0.0
  %vm708 = vcmp.ge.f32.partialorder %v562, 0.0
  %vm709 = vcmp.ge.f32.partialorder %v567, 0.0
  %vm710 = vcmp.ge.f32.partialorder %v572, 0.0
  %vm711 = vcmp.ge.f32.partialorder %v577, 0.0
  %vm712 = vcmp.ge.f32.partialorder %v582, 0.0
  %vm713 = vcmp.ge.f32.partialorder %v587, 0.0
  %vm714 = vcmp.ge.f32.partialorder %v592, 0.0
  %vm715 = vcmp.ge.f32.partialorder %v597, 0.0
  %vm716 = vcmp.ge.f32.partialorder %v602, 0.0
  %vm717 = vcmp.ge.f32.partialorder %v607, 0.0
  %vm718 = vcmp.ge.f32.partialorder %v612, 0.0
  %vm719 = vcmp.ge.f32.partialorder %v617, 0.0
  %vm720 = vcmp.ge.f32.partialorder %v622, 0.0
  %vm721 = vcmp.ge.f32.partialorder %v627, 0.0
  %vm722 = vcmp.ge.f32.partialorder %v632, 0.0
  %vm723 = vcmp.ge.f32.partialorder %v637, 0.0
  %vm724 = vcmp.ge.f32.partialorder %v642, 0.0
  %vm725 = vcmp.ge.f32.partialorder %v647, 0.0
  %vm726 = vcmp.ge.f32.partialorder %v652, 0.0
  %vm727 = vcmp.ge.f32.partialorder %v657, 0.0
  %vm728 = vcmp.ge.f32.partialorder %v662, 0.0
  %v729 = vmul.f32 %v347, 0.1
  %v730 = vmul.f32 %v352, 0.1
  %v731 = vmul.f32 %v357, 0.1
  %v732 = vmul.f32 %v362, 0.1
  %v733 = vmul.f32 %v367, 0.1
  %v734 = vmul.f32 %v372, 0.1
  %v735 = vmul.f32 %v377, 0.1
  %v736 = vmul.f32 %v382, 0.1
  %v737 = vmul.f32 %v387, 0.1
  %v738 = vmul.f32 %v392, 0.1
  %v739 = vmul.f32 %v397, 0.1
  %v740 = vmul.f32 %v402, 0.1
  %v741 = vmul.f32 %v407, 0.1
  %v742 = vmul.f32 %v412, 0.1
  %v743 = vmul.f32 %v417, 0.1
  %v744 = vmul.f32 %v422, 0.1
  %v745 = vmul.f32 %v427, 0.1
  %v746 = vmul.f32 %v432, 0.1
  %v747 = vmul.f32 %v437, 0.1
  %v748 = vmul.f32 %v442, 0.1
  %v749 = vmul.f32 %v447, 0.1
  %v750 = vmul.f32 %v452, 0.1
  %v751 = vmul.f32 %v457, 0.1
  %v752 = vmul.f32 %v462, 0.1
  %v753 = vmul.f32 %v467, 0.1
  %v754 = vmul.f32 %v472, 0.1
  %v755 = vmul.f32 %v477, 0.1
  %v756 = vmul.f32 %v482, 0.1
  %v757 = vmul.f32 %v487, 0.1
  %v758 = vmul.f32 %v492, 0.1
  %v759 = vmul.f32 %v497, 0.1
  %v760 = vmul.f32 %v502, 0.1
  %v761 = vmul.f32 %v507, 0.1
  %v762 = vmul.f32 %v512, 0.1
  %v763 = vmul.f32 %v517, 0.1
  %v764 = vmul.f32 %v522, 0.1
  %v765 = vmul.f32 %v527, 0.1
  %v766 = vmul.f32 %v532, 0.1
  %v767 = vmul.f32 %v537, 0.1
  %v768 = vmul.f32 %v542, 0.1
  %v769 = vmul.f32 %v547, 0.1
  %v770 = vmul.f32 %v552, 0.1
  %v771 = vmul.f32 %v557, 0.1
  %v772 = vmul.f32 %v562, 0.1
  %v773 = vmul.f32 %v567, 0.1
  %v774 = vmul.f32 %v572, 0.1
  %v775 = vmul.f32 %v577, 0.1
  %v776 = vmul.f32 %v582, 0.1
  %v777 = vmul.f32 %v587, 0.1
  %v778 = vmul.f32 %v592, 0.1
  %v779 = vmul.f32 %v597, 0.1
  %v780 = vmul.f32 %v602, 0.1
  %v781 = vmul.f32 %v607, 0.1
  %v782 = vmul.f32 %v612, 0.1
  %v783 = vmul.f32 %v617, 0.1
  %v784 = vmul.f32 %v622, 0.1
  %v785 = vmul.f32 %v627, 0.1
  %v786 = vmul.f32 %v632, 0.1
  %v787 = vmul.f32 %v637, 0.1
  %v788 = vmul.f32 %v642, 0.1
  %v789 = vmul.f32 %v647, 0.1
  %v790 = vmul.f32 %v652, 0.1
  %v791 = vmul.f32 %v657, 0.1
  %v792 = vmul.f32 %v662, 0.1
  %v793 = vsel %vm665, %v347, %v729
  %v794 = vsel %vm666, %v352, %v730
  %v795 = vsel %vm667, %v357, %v731
  %v796 = vsel %vm668, %v362, %v732
  %v797 = vsel %vm669, %v367, %v733
  %v798 = vsel %vm670, %v372, %v734
  %v799 = vsel %vm671, %v377, %v735
  %v800 = vsel %vm672, %v382, %v736
  %v801 = vsel %vm673, %v387, %v737
  %v802 = vsel %vm674, %v392, %v738
  %v803 = vsel %vm675, %v397, %v739
  %v804 = vsel %vm676, %v402, %v740
  %v805 = vsel %vm677, %v407, %v741
  %v806 = vsel %vm678, %v412, %v742
  %v807 = vsel %vm679, %v417, %v743
  %v808 = vsel %vm680, %v422, %v744
  %v809 = vsel %vm681, %v427, %v745
  %v810 = vsel %vm682, %v432, %v746
  %v811 = vsel %vm683, %v437, %v747
  %v812 = vsel %vm684, %v442, %v748
  %v813 = vsel %vm685, %v447, %v749
  %v814 = vsel %vm686, %v452, %v750
  %v815 = vsel %vm687, %v457, %v751
  %v816 = vsel %vm688, %v462, %v752
  %v817 = vsel %vm689, %v467, %v753
  %v818 = vsel %vm690, %v472, %v754
  %v819 = vsel %vm691, %v477, %v755
  %v820 = vsel %vm692, %v482, %v756
  %v821 = vsel %vm693, %v487, %v757
  %v822 = vsel %vm694, %v492, %v758
  %v823 = vsel %vm695, %v497, %v759
  %v824 = vsel %vm696, %v502, %v760
  %v825 = vsel %vm697, %v507, %v761
  %v826 = vsel %vm698, %v512, %v762
  %v827 = vsel %vm699, %v517, %v763
  %v828 = vsel %vm700, %v522, %v764
  %v829 = vsel %vm701, %v527, %v765
  %v830 = vsel %vm702, %v532, %v766
  %v831 = vsel %vm703, %v537, %v767
  %v832 = vsel %vm704, %v542, %v768
  %v833 = vsel %vm705, %v547, %v769
  %v834 = vsel %vm706, %v552, %v770
  %v835 = vsel %vm707, %v557, %v771
  %v836 = vsel %vm708, %v562, %v772
  %v837 = vsel %vm709, %v567, %v773
  %v838 = vsel %vm710, %v572, %v774
  %v839 = vsel %vm711, %v577, %v775
  %v840 = vsel %vm712, %v582, %v776
  %v841 = vsel %vm713, %v587, %v777
  %v842 = vsel %vm714, %v592, %v778
  %v843 = vsel %vm715, %v597, %v779
  %v844 = vsel %vm716, %v602, %v780
  %v845 = vsel %vm717, %v607, %v781
  %v846 = vsel %vm718, %v612, %v782
  %v847 = vsel %vm719, %v617, %v783
  %v848 = vsel %vm720, %v622, %v784
  %v849 = vsel %vm721, %v627, %v785
  %v850 = vsel %vm722, %v632, %v786
  %v851 = vsel %vm723, %v637, %v787
  %v852 = vsel %vm724, %v642, %v788
  %v853 = vsel %vm725, %v647, %v789
  %v854 = vsel %vm726, %v652, %v790
  %v855 = vsel %vm727, %v657, %v791
  %v856 = vsel %vm728, %v662, %v792
  %vm857 = vcmask 523264
  %858 = vst.msk [vmem:[%s3] sm:$0xff] %vm857, %v793
  %859 = vst.msk [vmem:[%s3 + $0x8] sm:$0xff] %vm857, %v794
  %860 = vst.msk [vmem:[%s3 + $0x10] sm:$0xff] %vm857, %v795
  %861 = vst.msk [vmem:[%s3 + $0x18] sm:$0xff] %vm857, %v796
  %862 = vst.msk [vmem:[%s3 + $0x20] sm:$0xff] %vm857, %v797
  %863 = vst.msk [vmem:[%s3 + $0x28] sm:$0xff] %vm857, %v798
  %864 = vst.msk [vmem:[%s3 + $0x30] sm:$0xff] %vm857, %v799
  %865 = vst.msk [vmem:[%s3 + $0x38] sm:$0xff] %vm857, %v800
  %866 = vst.msk [vmem:[%s3 + $0x40] sm:$0xff] %vm857, %v801
  %867 = vst.msk [vmem:[%s3 + $0x48] sm:$0xff] %vm857, %v802
  %868 = vst.msk [vmem:[%s3 + $0x50] sm:$0xff] %vm857, %v803
  %869 = vst.msk [vmem:[%s3 + $0x58] sm:$0xff] %vm857, %v804
  %870 = vst.msk [vmem:[%s3 + $0x60] sm:$0xff] %vm857, %v805
  %871 = vst.msk [vmem:[%s3 + $0x68] sm:$0xff] %vm857, %v806
  %872 = vst.msk [vmem:[%s3 + $0x70] sm:$0xff] %vm857, %v807
  %873 = vst.msk [vmem:[%s3 + $0x78] sm:$0xff] %vm857, %v808
  %874 = vst.msk [vmem:[%s3 + $0x80] sm:$0xff] %vm857, %v809
  %875 = vst.msk [vmem:[%s3 + $0x88] sm:$0xff] %vm857, %v810
  %876 = vst.msk [vmem:[%s3 + $0x90] sm:$0xff] %vm857, %v811
  %877 = vst.msk [vmem:[%s3 + $0x98] sm:$0xff] %vm857, %v812
  %878 = vst.msk [vmem:[%s3 + $0xa0] sm:$0xff] %vm857, %v813
  %879 = vst.msk [vmem:[%s3 + $0xa8] sm:$0xff] %vm857, %v814
  %880 = vst.msk [vmem:[%s3 + $0xb0] sm:$0xff] %vm857, %v815
  %881 = vst.msk [vmem:[%s3 + $0xb8] sm:$0xff] %vm857, %v816
  %882 = vst.msk [vmem:[%s3 + $0xc0] sm:$0xff] %vm857, %v817
  %883 = vst.msk [vmem:[%s3 + $0xc8] sm:$0xff] %vm857, %v818
  %884 = vst.msk [vmem:[%s3 + $0xd0] sm:$0xff] %vm857, %v819
  %885 = vst.msk [vmem:[%s3 + $0xd8] sm:$0xff] %vm857, %v820
  %886 = vst.msk [vmem:[%s3 + $0xe0] sm:$0xff] %vm857, %v821
  %887 = vst.msk [vmem:[%s3 + $0xe8] sm:$0xff] %vm857, %v822
  %888 = vst.msk [vmem:[%s3 + $0xf0] sm:$0xff] %vm857, %v823
  %889 = vst.msk [vmem:[%s3 + $0xf8] sm:$0xff] %vm857, %v824
  %890 = vst.msk [vmem:[%s3 + $0x100] sm:$0xff] %vm857, %v825
  %891 = vst.msk [vmem:[%s3 + $0x108] sm:$0xff] %vm857, %v826
  %892 = vst.msk [vmem:[%s3 + $0x110] sm:$0xff] %vm857, %v827
  %893 = vst.msk [vmem:[%s3 + $0x118] sm:$0xff] %vm857, %v828
  %894 = vst.msk [vmem:[%s3 + $0x120] sm:$0xff] %vm857, %v829
  %895 = vst.msk [vmem:[%s3 + $0x128] sm:$0xff] %vm857, %v830
  %896 = vst.msk [vmem:[%s3 + $0x130] sm:$0xff] %vm857, %v831
  %897 = vst.msk [vmem:[%s3 + $0x138] sm:$0xff] %vm857, %v832
  %898 = vst.msk [vmem:[%s3 + $0x140] sm:$0xff] %vm857, %v833
  %899 = vst.msk [vmem:[%s3 + $0x148] sm:$0xff] %vm857, %v834
  %900 = vst.msk [vmem:[%s3 + $0x150] sm:$0xff] %vm857, %v835
  %901 = vst.msk [vmem:[%s3 + $0x158] sm:$0xff] %vm857, %v836
  %902 = vst.msk [vmem:[%s3 + $0x160] sm:$0xff] %vm857, %v837
  %903 = vst.msk [vmem:[%s3 + $0x168] sm:$0xff] %vm857, %v838
  %904 = vst.msk [vmem:[%s3 + $0x170] sm:$0xff] %vm857, %v839
  %905 = vst.msk [vmem:[%s3 + $0x178] sm:$0xff] %vm857, %v840
  %906 = vst.msk [vmem:[%s3 + $0x180] sm:$0xff] %vm857, %v841
  %907 = vst.msk [vmem:[%s3 + $0x188] sm:$0xff] %vm857, %v842
  %908 = vst.msk [vmem:[%s3 + $0x190] sm:$0xff] %vm857, %v843
  %909 = vst.msk [vmem:[%s3 + $0x198] sm:$0xff] %vm857, %v844
  %910 = vst.msk [vmem:[%s3 + $0x1a0] sm:$0xff] %vm857, %v845
  %911 = vst.msk [vmem:[%s3 + $0x1a8] sm:$0xff] %vm857, %v846
  %912 = vst.msk [vmem:[%s3 + $0x1b0] sm:$0xff] %vm857, %v847
  %913 = vst.msk [vmem:[%s3 + $0x1b8] sm:$0xff] %vm857, %v848
  %914 = vst.msk [vmem:[%s3 + $0x1c0] sm:$0xff] %vm857, %v849
  %915 = vst.msk [vmem:[%s3 + $0x1c8] sm:$0xff] %vm857, %v850
  %916 = vst.msk [vmem:[%s3 + $0x1d0] sm:$0xff] %vm857, %v851
  %917 = vst.msk [vmem:[%s3 + $0x1d8] sm:$0xff] %vm857, %v852
  %918 = vst.msk [vmem:[%s3 + $0x1e0] sm:$0xff] %vm857, %v853
  %919 = vst.msk [vmem:[%s3 + $0x1e8] sm:$0xff] %vm857, %v854
  %920 = vst.msk [vmem:[%s3 + $0x1f0] sm:$0xff] %vm857, %v855
  %921 = vst.msk [vmem:[%s3 + $0x1f8] sm:$0xff] %vm857, %v856
  // Predicated region
  $region14: #{tpu_custom_call.1} parent=0 // pred_check
    _
  $region15: #{tpu_custom_call.1} parent=0 // pred_check_branch
    %923 = sbr.rel (0) target = $region17
  $region16: #{tpu_custom_call.1} parent=0 // pred_region
    _
  $region17: #{tpu_custom_call.1} parent=0 // pred_fallthru
    _
  // Predicated region
  $region18: #{tpu_custom_call.1} parent=0 // pred_check
    _
  $region19: #{tpu_custom_call.1} parent=0 // pred_check_branch
    %925 = sbr.rel (0) target = $region21
  $region20: #{tpu_custom_call.1} parent=0 // pred_region
    _
  $region21: #{tpu_custom_call.1} parent=0 // pred_fallthru
    _

</llo_original>
